<compile_context>
chip_gen: v7x
topology: tpu7x:2x2x1
jax: 0.10.0
libtpu: 0.0.40
codegen_flags: <defaults>
</compile_context>

<pallas_src>
import jax
import jax.numpy as jnp
from jax.experimental import pallas as pl
from jax.experimental.pallas import tpu as pltpu

LANE = 128     # vreg lane width    -> last-dim padding target
SUBLANE = 8    # vreg sublane width -> batch padding target


def _round_up(x, m):
    return ((x + m - 1) // m) * m


def make_fused_decoder_kernel(n_layers):
    """Build a kernel body: refs = (x, w0, b0, w1, b1, ..., o)."""
    def kernel(*refs):
        x_ref = refs[0]
        o_ref = refs[-1]
        h = x_ref[...]
        for i in range(n_layers):
            w_ref = refs[1 + 2 * i]
            b_ref = refs[2 + 2 * i]
            # Fused hot path per layer: ReLU -> MXU matmul (f32 acc) -> bias
            # add, all staying in VMEM/vregs; only the final result is stored.
            h = jnp.dot(jnp.maximum(h, 0.0), w_ref[...],
                        preferred_element_type=jnp.float32) + b_ref[...]
        o_ref[...] = h.astype(o_ref.dtype)
    return kernel


def decoder_forward(x, params, *, batch_tile=None):
    """x: [B, n_in]; params: list of (w [din, dout], b [dout]) -> [B, n_out]."""
    n_layers = len(params)
    B, n_in = x.shape
    n_out = params[-1][0].shape[1]

    # ---- pad features to lane multiples --------------------------------
    in_pad = _round_up(n_in, LANE)

    flat_params = []
    padded_shapes = []
    din_pad = in_pad
    for w, b in params:
        din, dout = w.shape
        dout_pad = _round_up(dout, LANE)
        # Zero padding keeps results exact: padded activation columns are 0,
        # padded weight rows/cols and bias entries are 0.
        w_p = jnp.zeros((din_pad, dout_pad), jnp.float32).at[:din, :dout].set(w)
        b_p = jnp.zeros((1, dout_pad), jnp.float32).at[0, :dout].set(b)
        flat_params += [w_p, b_p]
        padded_shapes += [(din_pad, dout_pad), (1, dout_pad)]
        din_pad = dout_pad
    out_pad_dim = din_pad

    # ---- pad batch and pick a batch tile (multiple of 8 sublanes) ------
    if batch_tile is None:
        batch_tile = min(_round_up(B, SUBLANE), 512)
    batch_tile = _round_up(batch_tile, SUBLANE)
    b_pad = _round_up(B, batch_tile)
    grid = (b_pad // batch_tile,)

    x_p = jnp.zeros((b_pad, in_pad), jnp.float32).at[:B, :n_in].set(x)

    # ---- specs: activation tiled over batch; params resident (const idx) --
    in_specs = [pl.BlockSpec((batch_tile, in_pad), lambda i: (i, 0))]
    for shp in padded_shapes:
        # Full-array block, constant block index -> fetched once, stays in VMEM.
        in_specs.append(pl.BlockSpec(shp, lambda i: (0, 0)))
    out_specs = pl.BlockSpec((batch_tile, out_pad_dim), lambda i: (i, 0))

    kernel = make_fused_decoder_kernel(n_layers)
    out_p = pl.pallas_call(
        kernel,
        out_shape=jax.ShapeDtypeStruct((b_pad, out_pad_dim), jnp.float32),
        grid=grid,
        in_specs=in_specs,
        out_specs=out_specs,
        compiler_params=pltpu.CompilerParams(
            dimension_semantics=("parallel",),
        ),
    )(x_p, *flat_params)

    # Slice back to the true output width (and true batch).
    return out_p[:B, :n_out]


def init_decoder_params(key, n_in, n_out, n_hidden):
    """Deterministic init mimicking nn.Linear default (uniform +/- 1/sqrt(fan_in)).

    Weights stored as [din, dout] (i.e. PyTorch weight.T), biases as [dout].
    """
    in_list = [n_in] + list(n_hidden)
    out_list = list(n_hidden) + [n_out]
    params = []
    for din, dout in zip(in_list, out_list):
        kw, kb, key = jax.random.split(key, 3)
        bound = 1.0 / float(din) ** 0.5
        w = jax.random.uniform(kw, (din, dout), jnp.float32, -bound, bound)
        b = jax.random.uniform(kb, (dout,), jnp.float32, -bound, bound)
        params.append((w, b))
    return params


def decoder_reference(x, params):
    """Pure-JAX reference (unpadded) for correctness check."""
    h = x
    for w, b in params:
        h = jnp.maximum(h, 0.0) @ w + b
    return h


if __name__ == "__main__":
    key = jax.random.PRNGKey(0)

    # Small shapes consistent with the module's forward (x: [batch, n_in]):
    batch = 22            # deliberately not a multiple of 8 to exercise padding
    n_in = 32
    n_hidden = [64, 48]
    n_out = 16

    kx, kp = jax.random.split(key)
    x = jax.random.normal(kx, (batch, n_in), dtype=jnp.float32)
    params = init_decoder_params(kp, n_in, n_out, n_hidden)
    ref = decoder_reference(x, params)

    # 1) Default single-tile path (grid = (1,), everything resident).
    fwd = jax.jit(decoder_forward)
    out = jax.block_until_ready(fwd(x, params))
    assert out.shape == (batch, n_out), out.shape
    assert jnp.allclose(out, ref, atol=1e-5, rtol=1e-5), float(
        jnp.max(jnp.abs(out - ref)))

    # 2) Multi-step grid path (batch tiled by 8 -> 3 grid steps), to exercise
    #    the pipelined / megacore-parallel code path.
    fwd_tiled = jax.jit(lambda xx, pp: decoder_forward(xx, pp, batch_tile=8))
    out_t = jax.block_until_ready(fwd_tiled(x, params))
    assert out_t.shape == (batch, n_out), out_t.shape
    assert jnp.allclose(out_t, ref, atol=1e-5, rtol=1e-5), float(
        jnp.max(jnp.abs(out_t - ref)))

    print("KERNEL_OK")
</pallas_src>

<mosaic_0001>
module attributes {stable_mosaic.version = 11 : i64} {
  func.func @kernel(%arg0: i32, %arg1: memref<24x128xf32, #tpu.memory_space<vmem>>, %arg2: memref<128x128xf32, #tpu.memory_space<vmem>>, %arg3: memref<1x128xf32, #tpu.memory_space<vmem>>, %arg4: memref<128x128xf32, #tpu.memory_space<vmem>>, %arg5: memref<1x128xf32, #tpu.memory_space<vmem>>, %arg6: memref<128x128xf32, #tpu.memory_space<vmem>>, %arg7: memref<1x128xf32, #tpu.memory_space<vmem>>, %arg8: memref<24x128xf32, #tpu.memory_space<vmem>>) attributes {dimension_semantics = [#tpu.dimension_semantics<parallel>], iteration_bounds = array<i64: 1>, scalar_prefetch = 0 : i64, scratch_operands = 0 : i64, tpu.core_type = #tpu.core_type<tc>, window_params = [{transform_indices = @transform_0, window_bounds = array<i64: 24, 128>}, {pipeline_mode = #tpu.pipeline_mode<synchronous>, transform_indices = @transform_1, window_bounds = array<i64: 128, 128>}, {pipeline_mode = #tpu.pipeline_mode<synchronous>, transform_indices = @transform_2, window_bounds = array<i64: 1, 128>}, {pipeline_mode = #tpu.pipeline_mode<synchronous>, transform_indices = @transform_3, window_bounds = array<i64: 128, 128>}, {pipeline_mode = #tpu.pipeline_mode<synchronous>, transform_indices = @transform_4, window_bounds = array<i64: 1, 128>}, {pipeline_mode = #tpu.pipeline_mode<synchronous>, transform_indices = @transform_5, window_bounds = array<i64: 128, 128>}, {pipeline_mode = #tpu.pipeline_mode<synchronous>, transform_indices = @transform_6, window_bounds = array<i64: 1, 128>}, {transform_indices = @transform_7, window_bounds = array<i64: 24, 128>}]} {
    %c0 = arith.constant 0 : index
    %c0_0 = arith.constant 0 : index
    %0 = vector.load %arg1[%c0, %c0_0] : memref<24x128xf32, #tpu.memory_space<vmem>>, vector<24x128xf32>
    %cst = arith.constant 0.000000e+00 : f32
    %1 = vector.broadcast %cst : f32 to vector<24x128xf32>
    %2 = arith.maximumf %0, %1 : vector<24x128xf32>
    %c0_1 = arith.constant 0 : index
    %c0_2 = arith.constant 0 : index
    %3 = vector.load %arg2[%c0_1, %c0_2] : memref<128x128xf32, #tpu.memory_space<vmem>>, vector<128x128xf32>
    %cst_3 = arith.constant dense<0.000000e+00> : vector<24x128xf32>
    %4 = tpu.matmul %2, %3, %cst_3 {dimension_numbers = #tpu.dot_dimension_numbers<[1], [0], [0], [1], [0, 0, 1, 1], [], []>} : vector<24x128xf32>, vector<128x128xf32>, vector<24x128xf32> -> vector<24x128xf32>
    %c0_4 = arith.constant 0 : index
    %c0_5 = arith.constant 0 : index
    %5 = vector.load %arg3[%c0_4, %c0_5] : memref<1x128xf32, #tpu.memory_space<vmem>>, vector<1x128xf32>
    %6 = vector.broadcast %5 : vector<1x128xf32> to vector<24x128xf32>
    %7 = arith.addf %4, %6 : vector<24x128xf32>
    %cst_6 = arith.constant 0.000000e+00 : f32
    %8 = vector.broadcast %cst_6 : f32 to vector<24x128xf32>
    %9 = arith.maximumf %7, %8 : vector<24x128xf32>
    %c0_7 = arith.constant 0 : index
    %c0_8 = arith.constant 0 : index
    %10 = vector.load %arg4[%c0_7, %c0_8] : memref<128x128xf32, #tpu.memory_space<vmem>>, vector<128x128xf32>
    %cst_9 = arith.constant dense<0.000000e+00> : vector<24x128xf32>
    %11 = tpu.matmul %9, %10, %cst_9 {dimension_numbers = #tpu.dot_dimension_numbers<[1], [0], [0], [1], [0, 0, 1, 1], [], []>} : vector<24x128xf32>, vector<128x128xf32>, vector<24x128xf32> -> vector<24x128xf32>
    %c0_10 = arith.constant 0 : index
    %c0_11 = arith.constant 0 : index
    %12 = vector.load %arg5[%c0_10, %c0_11] : memref<1x128xf32, #tpu.memory_space<vmem>>, vector<1x128xf32>
    %13 = vector.broadcast %12 : vector<1x128xf32> to vector<24x128xf32>
    %14 = arith.addf %11, %13 : vector<24x128xf32>
    %cst_12 = arith.constant 0.000000e+00 : f32
    %15 = vector.broadcast %cst_12 : f32 to vector<24x128xf32>
    %16 = arith.maximumf %14, %15 : vector<24x128xf32>
    %c0_13 = arith.constant 0 : index
    %c0_14 = arith.constant 0 : index
    %17 = vector.load %arg6[%c0_13, %c0_14] : memref<128x128xf32, #tpu.memory_space<vmem>>, vector<128x128xf32>
    %cst_15 = arith.constant dense<0.000000e+00> : vector<24x128xf32>
    %18 = tpu.matmul %16, %17, %cst_15 {dimension_numbers = #tpu.dot_dimension_numbers<[1], [0], [0], [1], [0, 0, 1, 1], [], []>} : vector<24x128xf32>, vector<128x128xf32>, vector<24x128xf32> -> vector<24x128xf32>
    %c0_16 = arith.constant 0 : index
    %c0_17 = arith.constant 0 : index
    %19 = vector.load %arg7[%c0_16, %c0_17] : memref<1x128xf32, #tpu.memory_space<vmem>>, vector<1x128xf32>
    %20 = vector.broadcast %19 : vector<1x128xf32> to vector<24x128xf32>
    %21 = arith.addf %18, %20 : vector<24x128xf32>
    %c0_18 = arith.constant 0 : index
    %c0_19 = arith.constant 0 : index
    %22 = vector.load %arg8[%c0_18, %c0_19] : memref<24x128xf32, #tpu.memory_space<vmem>>, vector<24x128xf32>
    tpu.vector_store %arg8[%c0_18, %c0_19], %21 {strides = array<i32>} : memref<24x128xf32, #tpu.memory_space<vmem>>, vector<24x128xf32>,
    return
  }
  func.func @transform_0(%arg0: i32) -> (i32, i32) {
    %c0_i32 = arith.constant 0 : i32
    %c0_i32_0 = arith.constant 0 : i32
    return %arg0, %c0_i32 : i32, i32
  }
  func.func @transform_1(%arg0: i32) -> (i32, i32) {
    %c0_i32 = arith.constant 0 : i32
    %c0_i32_0 = arith.constant 0 : i32
    %c0_i32_1 = arith.constant 0 : i32
    return %c0_i32, %c0_i32_0 : i32, i32
  }
  func.func @transform_2(%arg0: i32) -> (i32, i32) {
    %c0_i32 = arith.constant 0 : i32
    %c0_i32_0 = arith.constant 0 : i32
    %c0_i32_1 = arith.constant 0 : i32
    return %c0_i32, %c0_i32_0 : i32, i32
  }
  func.func @transform_3(%arg0: i32) -> (i32, i32) {
    %c0_i32 = arith.constant 0 : i32
    %c0_i32_0 = arith.constant 0 : i32
    %c0_i32_1 = arith.constant 0 : i32
    return %c0_i32, %c0_i32_0 : i32, i32
  }
  func.func @transform_4(%arg0: i32) -> (i32, i32) {
    %c0_i32 = arith.constant 0 : i32
    %c0_i32_0 = arith.constant 0 : i32
    %c0_i32_1 = arith.constant 0 : i32
    return %c0_i32, %c0_i32_0 : i32, i32
  }
  func.func @transform_5(%arg0: i32) -> (i32, i32) {
    %c0_i32 = arith.constant 0 : i32
    %c0_i32_0 = arith.constant 0 : i32
    %c0_i32_1 = arith.constant 0 : i32
    return %c0_i32, %c0_i32_0 : i32, i32
  }
  func.func @transform_6(%arg0: i32) -> (i32, i32) {
    %c0_i32 = arith.constant 0 : i32
    %c0_i32_0 = arith.constant 0 : i32
    %c0_i32_1 = arith.constant 0 : i32
    return %c0_i32, %c0_i32_0 : i32, i32
  }
  func.func @transform_7(%arg0: i32) -> (i32, i32) {
    %c0_i32 = arith.constant 0 : i32
    %c0_i32_0 = arith.constant 0 : i32
    return %arg0, %c0_i32 : i32, i32
  }
}

</mosaic_0001>

<llo_original>
// kernel: decoder_forward.1
$region0: #{decoder_forward.1}
  #allocation0 [shape = 'u32[]', space=smem, size = 0x4, offset = 0x4, fixed_abs, tag = 'smem constant byte address 0x4 - core index']
  #allocation1 [shape = 'u32[144,128]{1,0:T(1,128)}', space=vmem, size = 0x12000, scoped, tag = 'internal scratch']
  %s0 = inlined_call_operand.vmem [shape: f32[24,128], index: 0, kind: input, shape index: {}]
  %s1 = inlined_call_operand.vmem [shape: f32[128,128], index: 1, kind: input, shape index: {}]
  %s2 = inlined_call_operand.vmem [shape: f32[1,128], index: 2, kind: input, shape index: {}]
  %s3 = inlined_call_operand.vmem [shape: f32[128,128], index: 3, kind: input, shape index: {}]
  %s4 = inlined_call_operand.vmem [shape: f32[1,128], index: 4, kind: input, shape index: {}]
  %s5 = inlined_call_operand.vmem [shape: f32[128,128], index: 5, kind: input, shape index: {}]
  %s6 = inlined_call_operand.vmem [shape: f32[1,128], index: 6, kind: input, shape index: {}]
  %s7 = inlined_call_operand.vmem [shape: f32[24,128], index: 7, kind: output, shape index: {}]
  %s8 = sld [smem:[#allocation0]]
  $region38: #{decoder_forward.1} parent=0
    _
  %s10 = ssub.s32 1, %s8
  %s11 = scalar_select 0, %s10, %s8
  // Predicated region
  $region2: #{decoder_forward.1} parent=0 // pred_check
    _
  $region3: #{decoder_forward.1} parent=0 // pred_check_branch
    %13 = sbr.rel (0) target = $region5
  $region4: #{decoder_forward.1} parent=0 // pred_region
    _
  $region5: #{decoder_forward.1} parent=0 // pred_fallthru
    _
  // Predicated region
  $region6: #{decoder_forward.1} parent=0 // pred_check
    _
  $region7: #{decoder_forward.1} parent=0 // pred_check_branch
    %15 = sbr.rel (0) target = $region9
  $region8: #{decoder_forward.1} parent=0 // pred_region
    _
  $region9: #{decoder_forward.1} parent=0 // pred_fallthru
    _
  // Predicated region
  $region10: #{decoder_forward.1} parent=0 // pred_check
    _
  $region11: #{decoder_forward.1} parent=0 // pred_check_branch
    %17 = sbr.rel (0) target = $region13
  $region12: #{decoder_forward.1} parent=0 // pred_region
    _
  $region13: #{decoder_forward.1} parent=0 // pred_fallthru
    _
  // Predicated region
  $region14: #{decoder_forward.1} parent=0 // pred_check
    _
  $region15: #{decoder_forward.1} parent=0 // pred_check_branch
    %19 = sbr.rel (0) target = $region17
  $region16: #{decoder_forward.1} parent=0 // pred_region
    _
  $region17: #{decoder_forward.1} parent=0 // pred_fallthru
    _
  // Predicated region
  $region18: #{decoder_forward.1} parent=0 // pred_check
    _
  $region19: #{decoder_forward.1} parent=0 // pred_check_branch
    %21 = sbr.rel (0) target = $region21
  $region20: #{decoder_forward.1} parent=0 // pred_region
    _
  $region21: #{decoder_forward.1} parent=0 // pred_fallthru
    _
  // Predicated region
  $region22: #{decoder_forward.1} parent=0 // pred_check
    _
  $region23: #{decoder_forward.1} parent=0 // pred_check_branch
    %23 = sbr.rel (0) target = $region25
  $region24: #{decoder_forward.1} parent=0 // pred_region
    _
  $region25: #{decoder_forward.1} parent=0 // pred_fallthru
    _
  // Predicated region
  $region26: #{decoder_forward.1} parent=0 // pred_check
    _
  $region27: #{decoder_forward.1} parent=0 // pred_check_branch
    %25 = sbr.rel (0) target = $region29
  $region28: #{decoder_forward.1} parent=0 // pred_region
    _
  $region29: #{decoder_forward.1} parent=0 // pred_fallthru
    _
  %v26 = vld [vmem:[%s0] sm:$0xff]
  %v27 = vld [vmem:[%s0 + $0x8] sm:$0xff]
  %v28 = vld [vmem:[%s0 + $0x10] sm:$0xff]
  %v29 = vmax.f32 %v26, 0.0
  %v30 = vmax.f32 %v27, 0.0
  %v31 = vmax.f32 %v28, 0.0
  %v32 = vld [vmem:[%s1] sm:$0xff]
  %v33 = vld [vmem:[%s1 + $0x8] sm:$0xff]
  %v34 = vld [vmem:[%s1 + $0x10] sm:$0xff]
  %v35 = vld [vmem:[%s1 + $0x18] sm:$0xff]
  %v36 = vld [vmem:[%s1 + $0x20] sm:$0xff]
  %v37 = vld [vmem:[%s1 + $0x28] sm:$0xff]
  %v38 = vld [vmem:[%s1 + $0x30] sm:$0xff]
  %v39 = vld [vmem:[%s1 + $0x38] sm:$0xff]
  %v40 = vld [vmem:[%s1 + $0x40] sm:$0xff]
  %v41 = vld [vmem:[%s1 + $0x48] sm:$0xff]
  %v42 = vld [vmem:[%s1 + $0x50] sm:$0xff]
  %v43 = vld [vmem:[%s1 + $0x58] sm:$0xff]
  %v44 = vld [vmem:[%s1 + $0x60] sm:$0xff]
  %v45 = vld [vmem:[%s1 + $0x68] sm:$0xff]
  %v46 = vld [vmem:[%s1 + $0x70] sm:$0xff]
  %v47 = vld [vmem:[%s1 + $0x78] sm:$0xff]
  %v48 = vld [vmem:[%s2] sm:$0x1]
  %v50 = vlaneseq
  %v51 = vshrl.u32 %v50, 7
  %v52 = vsub.s32 0, %v51
  %v53 = vrot.slane %v48, %v52
  %55 = vmatprep.subr.mxu0 0.0
  %56 = vmatpush1.msra.mxu0 %v32
  %57 = vmatprep.subr.mxu0 0.0
  %58 = vmatpush1.msra.mxu0 %v33
  %59 = vmatprep.subr.mxu0 0.0
  %60 = vmatpush1.msra.mxu0 %v34
  %61 = vmatprep.subr.mxu0 0.0
  %62 = vmatpush1.msra.mxu0 %v35
  %63 = vmatprep.subr.mxu0 0.0
  %64 = vmatpush1.msra.mxu0 %v36
  %65 = vmatprep.subr.mxu0 0.0
  %66 = vmatpush1.msra.mxu0 %v37
  %67 = vmatprep.subr.mxu0 0.0
  %68 = vmatpush1.msra.mxu0 %v38
  %69 = vmatprep.subr.mxu0 0.0
  %70 = vmatpush1.msra.mxu0 %v39
  %71 = vmatprep.subr.mxu0 0.0
  %72 = vmatpush1.msra.mxu0 %v40
  %73 = vmatprep.subr.mxu0 0.0
  %74 = vmatpush1.msra.mxu0 %v41
  %75 = vmatprep.subr.mxu0 0.0
  %76 = vmatpush1.msra.mxu0 %v42
  %77 = vmatprep.subr.mxu0 0.0
  %78 = vmatpush1.msra.mxu0 %v43
  %79 = vmatprep.subr.mxu0 0.0
  %80 = vmatpush1.msra.mxu0 %v44
  %81 = vmatprep.subr.mxu0 0.0
  %82 = vmatpush1.msra.mxu0 %v45
  %83 = vmatprep.subr.mxu0 0.0
  %84 = vmatpush1.msra.mxu0 %v46
  %85 = vmatprep.subr.mxu0 0.0
  %86 = vmatpush1.msra.mxu0 %v47
  %87 = vmatprep.subr.mxu0 0.0
  %88 = vmatpush1.msra.mxu0 0.0
  %89 = vmatprep.subr.mxu0 0.0
  %90 = vmatpush1.msra.mxu0 0.0
  %91 = vmatprep.subr.mxu0 0.0
  %92 = vmatpush1.msra.mxu0 0.0
  %93 = vmatprep.subr.mxu0 0.0
  %94 = vmatpush1.msra.mxu0 0.0
  %95 = vmatprep.subr.mxu0 0.0
  %96 = vmatpush1.msra.mxu0 0.0
  %97 = vmatprep.subr.mxu0 0.0
  %98 = vmatpush1.msra.mxu0 0.0
  %99 = vmatprep.subr.mxu0 0.0
  %100 = vmatpush1.msra.mxu0 0.0
  %101 = vmatprep.subr.mxu0 0.0
  %102 = vmatpush1.msra.mxu0 0.0
  %103 = vmatprep.subr.mxu0 0.0
  %104 = vmatpush1.msra.mxu0 0.0
  %105 = vmatprep.subr.mxu0 0.0
  %106 = vmatpush1.msra.mxu0 0.0
  %107 = vmatprep.subr.mxu0 0.0
  %108 = vmatpush1.msra.mxu0 0.0
  %109 = vmatprep.subr.mxu0 0.0
  %110 = vmatpush1.msra.mxu0 0.0
  %111 = vmatprep.subr.mxu0 0.0
  %112 = vmatpush1.msra.mxu0 0.0
  %113 = vmatprep.subr.mxu0 0.0
  %114 = vmatpush1.msra.mxu0 0.0
  %115 = vmatprep.subr.mxu0 0.0
  %116 = vmatpush1.msra.mxu0 0.0
  %117 = vmatprep.subr.mxu0 0.0
  %118 = vmatpush1.msra.mxu0 0.0
  %119 = vmatprep.mubr.f32.mxu0 0.0
  %120 = vmatmul.mubr.f32.gmra.mrb[0].mxu0 %v29
  %v121 = vpop.f32.mrb[0].mxu0
  %v122 = vadd.f32 %v53, %v121
  %v123 = vpop.f32.mrb[0].mxu0
  %124 = vmatprep.mubr.f32.mxu0 0.0
  %125 = vmatmul.mubr.f32.gmra.mrb[0].mxu0 %v30
  %v126 = vpop.f32.mrb[0].mxu0
  %v127 = vadd.f32 %v53, %v126
  %v128 = vpop.f32.mrb[0].mxu0
  %129 = vmatprep.mubr.f32.mxu0 0.0
  %130 = vmatmul.mubr.f32.gmra.mrb[0].mxu0 %v31
  %v131 = vpop.f32.mrb[0].mxu0
  %v132 = vadd.f32 %v53, %v131
  %v133 = vpop.f32.mrb[0].mxu0
  %134 = vdwg.mxu0
  %v135 = vmax.f32 %v122, 0.0
  %v136 = vmax.f32 %v127, 0.0
  %v137 = vmax.f32 %v132, 0.0
  %v138 = vld [vmem:[%s3] sm:$0xff]
  %v139 = vld [vmem:[%s3 + $0x8] sm:$0xff]
  %v140 = vld [vmem:[%s3 + $0x10] sm:$0xff]
  %v141 = vld [vmem:[%s3 + $0x18] sm:$0xff]
  %v142 = vld [vmem:[%s3 + $0x20] sm:$0xff]
  %v143 = vld [vmem:[%s3 + $0x28] sm:$0xff]
  %v144 = vld [vmem:[%s3 + $0x30] sm:$0xff]
  %v145 = vld [vmem:[%s3 + $0x38] sm:$0xff]
  %v146 = vld [vmem:[%s3 + $0x40] sm:$0xff]
  %v147 = vld [vmem:[%s3 + $0x48] sm:$0xff]
  %v148 = vld [vmem:[%s3 + $0x50] sm:$0xff]
  %v149 = vld [vmem:[%s3 + $0x58] sm:$0xff]
  %v150 = vld [vmem:[%s3 + $0x60] sm:$0xff]
  %v151 = vld [vmem:[%s3 + $0x68] sm:$0xff]
  %v152 = vld [vmem:[%s3 + $0x70] sm:$0xff]
  %v153 = vld [vmem:[%s3 + $0x78] sm:$0xff]
  %v154 = vld [vmem:[%s4] sm:$0x1]
  %v156 = vlaneseq
  %v157 = vshrl.u32 %v156, 7
  %v158 = vsub.s32 0, %v157
  %v159 = vrot.slane %v154, %v158
  %161 = vmatprep.subr.mxu0 0.0
  %162 = vmatpush1.msra.mxu0 %v138
  %163 = vmatprep.subr.mxu0 0.0
  %164 = vmatpush1.msra.mxu0 %v139
  %165 = vmatprep.subr.mxu0 0.0
  %166 = vmatpush1.msra.mxu0 %v140
  %167 = vmatprep.subr.mxu0 0.0
  %168 = vmatpush1.msra.mxu0 %v141
  %169 = vmatprep.subr.mxu0 0.0
  %170 = vmatpush1.msra.mxu0 %v142
  %171 = vmatprep.subr.mxu0 0.0
  %172 = vmatpush1.msra.mxu0 %v143
  %173 = vmatprep.subr.mxu0 0.0
  %174 = vmatpush1.msra.mxu0 %v144
  %175 = vmatprep.subr.mxu0 0.0
  %176 = vmatpush1.msra.mxu0 %v145
  %177 = vmatprep.subr.mxu0 0.0
  %178 = vmatpush1.msra.mxu0 %v146
  %179 = vmatprep.subr.mxu0 0.0
  %180 = vmatpush1.msra.mxu0 %v147
  %181 = vmatprep.subr.mxu0 0.0
  %182 = vmatpush1.msra.mxu0 %v148
  %183 = vmatprep.subr.mxu0 0.0
  %184 = vmatpush1.msra.mxu0 %v149
  %185 = vmatprep.subr.mxu0 0.0
  %186 = vmatpush1.msra.mxu0 %v150
  %187 = vmatprep.subr.mxu0 0.0
  %188 = vmatpush1.msra.mxu0 %v151
  %189 = vmatprep.subr.mxu0 0.0
  %190 = vmatpush1.msra.mxu0 %v152
  %191 = vmatprep.subr.mxu0 0.0
  %192 = vmatpush1.msra.mxu0 %v153
  %193 = vmatprep.subr.mxu0 0.0
  %194 = vmatpush1.msra.mxu0 0.0
  %195 = vmatprep.subr.mxu0 0.0
  %196 = vmatpush1.msra.mxu0 0.0
  %197 = vmatprep.subr.mxu0 0.0
  %198 = vmatpush1.msra.mxu0 0.0
  %199 = vmatprep.subr.mxu0 0.0
  %200 = vmatpush1.msra.mxu0 0.0
  %201 = vmatprep.subr.mxu0 0.0
  %202 = vmatpush1.msra.mxu0 0.0
  %203 = vmatprep.subr.mxu0 0.0
  %204 = vmatpush1.msra.mxu0 0.0
  %205 = vmatprep.subr.mxu0 0.0
  %206 = vmatpush1.msra.mxu0 0.0
  %207 = vmatprep.subr.mxu0 0.0
  %208 = vmatpush1.msra.mxu0 0.0
  %209 = vmatprep.subr.mxu0 0.0
  %210 = vmatpush1.msra.mxu0 0.0
  %211 = vmatprep.subr.mxu0 0.0
  %212 = vmatpush1.msra.mxu0 0.0
  %213 = vmatprep.subr.mxu0 0.0
  %214 = vmatpush1.msra.mxu0 0.0
  %215 = vmatprep.subr.mxu0 0.0
  %216 = vmatpush1.msra.mxu0 0.0
  %217 = vmatprep.subr.mxu0 0.0
  %218 = vmatpush1.msra.mxu0 0.0
  %219 = vmatprep.subr.mxu0 0.0
  %220 = vmatpush1.msra.mxu0 0.0
  %221 = vmatprep.subr.mxu0 0.0
  %222 = vmatpush1.msra.mxu0 0.0
  %223 = vmatprep.subr.mxu0 0.0
  %224 = vmatpush1.msra.mxu0 0.0
  %225 = vmatprep.mubr.f32.mxu0 0.0
  %226 = vmatmul.mubr.f32.gmra.mrb[0].mxu0 %v135
  %v227 = vpop.f32.mrb[0].mxu0
  %v228 = vadd.f32 %v159, %v227
  %v229 = vpop.f32.mrb[0].mxu0
  %230 = vmatprep.mubr.f32.mxu0 0.0
  %231 = vmatmul.mubr.f32.gmra.mrb[0].mxu0 %v136
  %v232 = vpop.f32.mrb[0].mxu0
  %v233 = vadd.f32 %v159, %v232
  %v234 = vpop.f32.mrb[0].mxu0
  %235 = vmatprep.mubr.f32.mxu0 0.0
  %236 = vmatmul.mubr.f32.gmra.mrb[0].mxu0 %v137
  %v237 = vpop.f32.mrb[0].mxu0
  %v238 = vadd.f32 %v159, %v237
  %v239 = vpop.f32.mrb[0].mxu0
  %240 = vdwg.mxu0
  %v241 = vmax.f32 %v228, 0.0
  %v242 = vmax.f32 %v233, 0.0
  %v243 = vmax.f32 %v238, 0.0
  %v244 = vld [vmem:[%s5] sm:$0xff]
  %v245 = vld [vmem:[%s5 + $0x8] sm:$0xff]
  %v246 = vld [vmem:[%s5 + $0x10] sm:$0xff]
  %v247 = vld [vmem:[%s5 + $0x18] sm:$0xff]
  %v248 = vld [vmem:[%s5 + $0x20] sm:$0xff]
  %v249 = vld [vmem:[%s5 + $0x28] sm:$0xff]
  %v250 = vld [vmem:[%s5 + $0x30] sm:$0xff]
  %v251 = vld [vmem:[%s5 + $0x38] sm:$0xff]
  %v252 = vld [vmem:[%s5 + $0x40] sm:$0xff]
  %v253 = vld [vmem:[%s5 + $0x48] sm:$0xff]
  %v254 = vld [vmem:[%s5 + $0x50] sm:$0xff]
  %v255 = vld [vmem:[%s5 + $0x58] sm:$0xff]
  %v256 = vld [vmem:[%s5 + $0x60] sm:$0xff]
  %v257 = vld [vmem:[%s5 + $0x68] sm:$0xff]
  %v258 = vld [vmem:[%s5 + $0x70] sm:$0xff]
  %v259 = vld [vmem:[%s5 + $0x78] sm:$0xff]
  %v260 = vld [vmem:[%s6] sm:$0x1]
  %v262 = vlaneseq
  %v263 = vshrl.u32 %v262, 7
  %v264 = vsub.s32 0, %v263
  %v265 = vrot.slane %v260, %v264
  %267 = vmatprep.subr.mxu0 0.0
  %268 = vmatpush1.msra.mxu0 %v244
  %269 = vmatprep.subr.mxu0 0.0
  %270 = vmatpush1.msra.mxu0 %v245
  %271 = vmatprep.subr.mxu0 0.0
  %272 = vmatpush1.msra.mxu0 %v246
  %273 = vmatprep.subr.mxu0 0.0
  %274 = vmatpush1.msra.mxu0 %v247
  %275 = vmatprep.subr.mxu0 0.0
  %276 = vmatpush1.msra.mxu0 %v248
  %277 = vmatprep.subr.mxu0 0.0
  %278 = vmatpush1.msra.mxu0 %v249
  %279 = vmatprep.subr.mxu0 0.0
  %280 = vmatpush1.msra.mxu0 %v250
  %281 = vmatprep.subr.mxu0 0.0
  %282 = vmatpush1.msra.mxu0 %v251
  %283 = vmatprep.subr.mxu0 0.0
  %284 = vmatpush1.msra.mxu0 %v252
  %285 = vmatprep.subr.mxu0 0.0
  %286 = vmatpush1.msra.mxu0 %v253
  %287 = vmatprep.subr.mxu0 0.0
  %288 = vmatpush1.msra.mxu0 %v254
  %289 = vmatprep.subr.mxu0 0.0
  %290 = vmatpush1.msra.mxu0 %v255
  %291 = vmatprep.subr.mxu0 0.0
  %292 = vmatpush1.msra.mxu0 %v256
  %293 = vmatprep.subr.mxu0 0.0
  %294 = vmatpush1.msra.mxu0 %v257
  %295 = vmatprep.subr.mxu0 0.0
  %296 = vmatpush1.msra.mxu0 %v258
  %297 = vmatprep.subr.mxu0 0.0
  %298 = vmatpush1.msra.mxu0 %v259
  %299 = vmatprep.subr.mxu0 0.0
  %300 = vmatpush1.msra.mxu0 0.0
  %301 = vmatprep.subr.mxu0 0.0
  %302 = vmatpush1.msra.mxu0 0.0
  %303 = vmatprep.subr.mxu0 0.0
  %304 = vmatpush1.msra.mxu0 0.0
  %305 = vmatprep.subr.mxu0 0.0
  %306 = vmatpush1.msra.mxu0 0.0
  %307 = vmatprep.subr.mxu0 0.0
  %308 = vmatpush1.msra.mxu0 0.0
  %309 = vmatprep.subr.mxu0 0.0
  %310 = vmatpush1.msra.mxu0 0.0
  %311 = vmatprep.subr.mxu0 0.0
  %312 = vmatpush1.msra.mxu0 0.0
  %313 = vmatprep.subr.mxu0 0.0
  %314 = vmatpush1.msra.mxu0 0.0
  %315 = vmatprep.subr.mxu0 0.0
  %316 = vmatpush1.msra.mxu0 0.0
  %317 = vmatprep.subr.mxu0 0.0
  %318 = vmatpush1.msra.mxu0 0.0
  %319 = vmatprep.subr.mxu0 0.0
  %320 = vmatpush1.msra.mxu0 0.0
  %321 = vmatprep.subr.mxu0 0.0
  %322 = vmatpush1.msra.mxu0 0.0
  %323 = vmatprep.subr.mxu0 0.0
  %324 = vmatpush1.msra.mxu0 0.0
  %325 = vmatprep.subr.mxu0 0.0
  %326 = vmatpush1.msra.mxu0 0.0
  %327 = vmatprep.subr.mxu0 0.0
  %328 = vmatpush1.msra.mxu0 0.0
  %329 = vmatprep.subr.mxu0 0.0
  %330 = vmatpush1.msra.mxu0 0.0
  %331 = vmatprep.mubr.f32.mxu0 0.0
  %332 = vmatmul.mubr.f32.gmra.mrb[0].mxu0 %v241
  %v333 = vpop.f32.mrb[0].mxu0
  %v334 = vadd.f32 %v265, %v333
  %v335 = vpop.f32.mrb[0].mxu0
  %336 = vmatprep.mubr.f32.mxu0 0.0
  %337 = vmatmul.mubr.f32.gmra.mrb[0].mxu0 %v242
  %v338 = vpop.f32.mrb[0].mxu0
  %v339 = vadd.f32 %v265, %v338
  %v340 = vpop.f32.mrb[0].mxu0
  %341 = vmatprep.mubr.f32.mxu0 0.0
  %342 = vmatmul.mubr.f32.gmra.mrb[0].mxu0 %v243
  %v343 = vpop.f32.mrb[0].mxu0
  %v344 = vadd.f32 %v265, %v343
  %v345 = vpop.f32.mrb[0].mxu0
  %346 = vdwg.mxu0
  %347 = vst [vmem:[%s7] sm:$0xff] %v334
  %348 = vst [vmem:[%s7 + $0x8] sm:$0xff] %v339
  %349 = vst [vmem:[%s7 + $0x10] sm:$0xff] %v344
  // Predicated region
  $region30: #{decoder_forward.1} parent=0 // pred_check
    _
  $region31: #{decoder_forward.1} parent=0 // pred_check_branch
    %351 = sbr.rel (0) target = $region33
  $region32: #{decoder_forward.1} parent=0 // pred_region
    _
  $region33: #{decoder_forward.1} parent=0 // pred_fallthru
    _
  // Predicated region
  $region34: #{decoder_forward.1} parent=0 // pred_check
    _
  $region35: #{decoder_forward.1} parent=0 // pred_check_branch
    %353 = sbr.rel (0) target = $region37
  $region36: #{decoder_forward.1} parent=0 // pred_region
    _
  $region37: #{decoder_forward.1} parent=0 // pred_fallthru
    _

</llo_original>
